<compile_context>
chip_gen: v6e
topology: v6e:2x2x1
jax: 0.10.0
libtpu: 0.0.40
codegen_flags: <defaults>
</compile_context>

<pallas_src>
import jax
import jax.numpy as jnp
from jax.experimental import pallas as pl
from jax.experimental.pallas import tpu as pltpu


# -----------------------------------------------------------------------------
# Kernel
# -----------------------------------------------------------------------------
def upsample_kernel(x_ref, ah_ref, awt_ref, o_ref):
    """One (batch, channel-tile) block per grid step.

    x_ref:   (1, TC, H, W)          input tile (NCHW, input dtype)
    ah_ref:  (H_out, H)             row (height) interpolation matrix
    awt_ref: (W, W_out)             column (width) interpolation matrix (pre-T)
    o_ref:   (1, TC, H_out, W_out)  output tile
    """
    x = x_ref[0]                                            # (TC, H, W)
    tc, h, w = x.shape
    h_out = ah_ref.shape[0]
    w_out = awt_ref.shape[1]

    # Width pass on the MXU: (TC*H, W) @ (W, W_out).  Merging the leading
    # (TC, H) dims is layout-free and gives one big matmul per tile.
    y = jnp.dot(x.reshape(tc * h, w), awt_ref[...],
                preferred_element_type=jnp.float32)         # f32 accumulate
    y = y.reshape(tc, h, w_out).astype(ah_ref.dtype)        # back to compute dt

    # Height pass: batched matmul, channels = batch dim.  The result lands
    # directly as (TC, H_out, W_out), so the store needs no relayout.
    ah_b = jnp.broadcast_to(ah_ref[...][None], (tc, h_out, h))
    out = jax.lax.dot_general(
        ah_b, y,
        dimension_numbers=(((2,), (1,)), ((0,), (0,))),
        preferred_element_type=jnp.float32)                 # (TC, H_out, W_out)

    o_ref[0] = out.astype(o_ref.dtype)


# -----------------------------------------------------------------------------
# Interpolation matrices
# -----------------------------------------------------------------------------
def _resize_matrix(n_in, n_out, mode, align_corners, dtype):
    """(n_out, n_in) interpolation matrix for one spatial axis, cast to dtype."""
    if mode in ("repeat", "nearest"):
        rows = jnp.arange(n_out)
        cols = jnp.clip((rows * n_in) // n_out, 0, n_in - 1)
        a = jnp.zeros((n_out, n_in), jnp.float32).at[rows, cols].set(1.0)
        return a.astype(dtype)
    # bilinear (per-axis linear weights)
    if n_in == 1:
        return jnp.ones((n_out, 1), jnp.float32).astype(dtype)
    if align_corners:
        if n_out == 1:
            src = jnp.zeros((1,), jnp.float32)
        else:
            src = jnp.arange(n_out, dtype=jnp.float32) * ((n_in - 1) / (n_out - 1))
    else:
        src = (jnp.arange(n_out, dtype=jnp.float32) + 0.5) * (n_in / n_out) - 0.5
        src = jnp.clip(src, 0.0, n_in - 1)
    lo = jnp.clip(jnp.floor(src).astype(jnp.int32), 0, n_in - 1)
    hi = jnp.clip(lo + 1, 0, n_in - 1)
    frac = src - lo.astype(jnp.float32)
    rows = jnp.arange(n_out)
    a = jnp.zeros((n_out, n_in), jnp.float32)
    a = a.at[rows, lo].add(1.0 - frac)
    a = a.at[rows, hi].add(frac)
    return a.astype(dtype)


# -----------------------------------------------------------------------------
# Tiling heuristics
# -----------------------------------------------------------------------------
def _vmem_capacity_bytes():
    try:
        info = pltpu.get_tpu_info()
        cap = int(getattr(info, "vmem_capacity_bytes", 0))
        if cap > 0:
            return cap
    except Exception:
        pass
    return 64 * 1024 * 1024   # conservative fallback: v7x per-TensorCore VMEM


def _pad(n, m):
    return -(-n // m) * m


def _pick_c_tile(N, C, H, W, H_out, W_out, in_itemsize, mat_itemsize, budget):
    """Largest channel tile whose per-step VMEM footprint fits `budget`, while
    preferring >=4 (even) grid steps (pipeline depth + v7x 2-TC balance)."""
    def step_bytes(ct):
        in_tile  = ct * _pad(H, 8) * _pad(W, 128) * in_itemsize
        out_tile = ct * _pad(H_out, 8) * _pad(W_out, 128) * in_itemsize
        y_f32    = ct * _pad(H, 8) * _pad(W_out, 128) * 4
        o_f32    = ct * _pad(H_out, 8) * _pad(W_out, 128) * 4
        ah_bcast = ct * _pad(H_out, 8) * _pad(H, 128) * mat_itemsize
        mats     = 2 * (_pad(H_out, 8) * _pad(H, 128)
                        + _pad(W, 8) * _pad(W_out, 128)) * mat_itemsize
        # in/out tiles are double-buffered by the BlockSpec pipeline.
        return 2 * (in_tile + out_tile) + y_f32 + o_f32 + ah_bcast + mats

    divisors = [d for d in range(C, 0, -1) if C % d == 0]
    fitting = [d for d in divisors if step_bytes(d) <= budget] or [1]
    good = [d for d in fitting
            if N * (C // d) >= 4 and (N * (C // d)) % 2 == 0]
    return good[0] if good else fitting[0]


# -----------------------------------------------------------------------------
# Wrapper
# -----------------------------------------------------------------------------
def upsample_layer(x, *, mode="bilinear", size=None, factor=2,
                   align_corners=True, c_tile=None):
    """UpSampleLayer.forward for NCHW input `x` (returns NCHW, same dtype)."""
    N, C, H, W = x.shape
    if mode == "repeat":
        if size is not None:
            raise NotImplementedError
    elif mode not in ("nearest", "bilinear"):
        # TODO(synk): 'bicubic'/'area'/'trilinear' not implemented; 'linear' is
        # 3-D-only in torch and never applies to this 4-D layer.
        raise NotImplementedError("Upsample(mode=%s) not implemented." % mode)

    if size is not None:
        H_out, W_out = tuple(size) if isinstance(size, (tuple, list)) else (size, size)
    else:
        H_out, W_out = H * factor, W * factor

    # bf16 activations stay bf16 on the MXU (accumulation in f32); otherwise f32.
    mat_dtype = x.dtype if jnp.issubdtype(x.dtype, jnp.floating) else jnp.float32
    mat_itemsize = jnp.dtype(mat_dtype).itemsize
    a_h = _resize_matrix(H, H_out, mode, align_corners, mat_dtype)      # (H_out, H)
    a_wt = _resize_matrix(W, W_out, mode, align_corners, mat_dtype).T   # (W, W_out)

    cap = _vmem_capacity_bytes()
    if c_tile is None:
        c_tile = _pick_c_tile(N, C, H, W, H_out, W_out,
                              x.dtype.itemsize, mat_itemsize,
                              budget=int(cap * 0.40))
    grid = (N, C // c_tile)

    flops = 2 * N * C * (H * W * W_out + H_out * H * W_out)
    bytes_accessed = (N * C * (H * W + H_out * W_out) * x.dtype.itemsize
                      + (H_out * H + W * W_out) * mat_itemsize)

    return pl.pallas_call(
        upsample_kernel,
        out_shape=jax.ShapeDtypeStruct((N, C, H_out, W_out), x.dtype),
        grid_spec=pltpu.PrefetchScalarGridSpec(
            num_scalar_prefetch=0,
            grid=grid,
            in_specs=[
                pl.BlockSpec((1, c_tile, H, W), lambda n, c: (n, c, 0, 0)),
                pl.BlockSpec((H_out, H), lambda n, c: (0, 0)),
                pl.BlockSpec((W, W_out), lambda n, c: (0, 0)),
            ],
            out_specs=pl.BlockSpec((1, c_tile, H_out, W_out),
                                   lambda n, c: (n, c, 0, 0)),
        ),
        compiler_params=pltpu.CompilerParams(
            dimension_semantics=("parallel", "parallel"),
            vmem_limit_bytes=int(cap * 0.70)),
        cost_estimate=pl.CostEstimate(flops=flops, transcendentals=0,
                                      bytes_accessed=bytes_accessed),
    )(x, a_h, a_wt)


# -----------------------------------------------------------------------------
# Pure-JAX references (independent gather/lerp paths).
# -----------------------------------------------------------------------------
def reference_bilinear(x, factor, align_corners=True):
    N, C, H, W = x.shape
    Ho, Wo = H * factor, W * factor

    def coords(n_in, n_out):
        if align_corners:
            src = jnp.arange(n_out, dtype=jnp.float32) * ((n_in - 1) / (n_out - 1))
        else:
            src = (jnp.arange(n_out, dtype=jnp.float32) + 0.5) * (n_in / n_out) - 0.5
            src = jnp.clip(src, 0.0, n_in - 1)
        lo = jnp.clip(jnp.floor(src).astype(jnp.int32), 0, n_in - 1)
        hi = jnp.clip(lo + 1, 0, n_in - 1)
        return lo, hi, src - lo.astype(jnp.float32)

    hl, hh, hf = coords(H, Ho)
    wl, wh, wf = coords(W, Wo)
    gather = lambda a, r, c: a[:, :, r][:, :, :, c]
    x00, x01 = gather(x, hl, wl), gather(x, hl, wh)
    x10, x11 = gather(x, hh, wl), gather(x, hh, wh)
    wf_ = wf[None, None, None, :]
    hf_ = hf[None, None, :, None]
    top = x00 * (1.0 - wf_) + x01 * wf_
    bot = x10 * (1.0 - wf_) + x11 * wf_
    return top * (1.0 - hf_) + bot * hf_


def reference_nearest(x, size):
    H, W = x.shape[-2:]
    Ho, Wo = size
    rows = (jnp.arange(Ho) * H) // Ho
    cols = (jnp.arange(Wo) * W) // Wo
    return x[:, :, rows][:, :, :, cols]


if __name__ == "__main__":
    key = jax.random.PRNGKey(0)
    N, C, H, W = 2, 4, 16, 16
    factor = 2
    x = jax.random.normal(key, (N, C, H, W), dtype=jnp.float32)

    # 1) Default UpSampleLayer(): bilinear, factor=2, align_corners=True (f32).
    out = jax.block_until_ready(
        upsample_layer(x, mode="bilinear", factor=factor, align_corners=True))
    ref = reference_bilinear(x, factor, align_corners=True)
    assert out.shape == (N, C, H * factor, W * factor), out.shape
    assert jnp.allclose(out, ref, rtol=1e-5, atol=1e-5), \
        float(jnp.max(jnp.abs(out - ref)))

    # 2) Same layer with bf16 activations (bf16 stays on the MXU, f32 accum).
    out_bf = jax.block_until_ready(
        upsample_layer(x.astype(jnp.bfloat16), mode="bilinear", factor=factor,
                       align_corners=True))
    ref_bf = reference_bilinear(x.astype(jnp.bfloat16).astype(jnp.float32),
                                factor, align_corners=True)
    assert out_bf.dtype == jnp.bfloat16
    assert float(jnp.max(jnp.abs(out_bf.astype(jnp.float32) - ref_bf))) < 1e-1

    # 3) mode='repeat' (repeat_interleave along W then H), full-channel tile.
    out_rep = jax.block_until_ready(
        upsample_layer(x, mode="repeat", factor=factor, c_tile=4))
    ref_rep = jnp.repeat(jnp.repeat(x, factor, axis=-1), factor, axis=-2)
    assert jnp.allclose(out_rep, ref_rep), \
        float(jnp.max(jnp.abs(out_rep - ref_rep)))

    # 4) mode='nearest' with an explicit size= target.
    out_nn = jax.block_until_ready(upsample_layer(x, mode="nearest", size=(24, 24)))
    ref_nn = reference_nearest(x, (24, 24))
    assert jnp.allclose(out_nn, ref_nn), \
        float(jnp.max(jnp.abs(out_nn - ref_nn)))

    print("KERNEL_OK")
</pallas_src>

<mosaic_0001>
module attributes {stable_mosaic.version = 11 : i64} {
  func.func @upsample_kernel(%arg0: i32, %arg1: i32, %arg2: memref<1x2x16x16xf32, #tpu.memory_space<vmem>>, %arg3: memref<32x16xf32, #tpu.memory_space<vmem>>, %arg4: memref<16x32xf32, #tpu.memory_space<vmem>>, %arg5: memref<1x2x32x32xf32, #tpu.memory_space<vmem>>) attributes {dimension_semantics = [#tpu.dimension_semantics<parallel>, #tpu.dimension_semantics<parallel>], iteration_bounds = array<i64: 2, 2>, scalar_prefetch = 0 : i64, scratch_operands = 0 : i64, tpu.core_type = #tpu.core_type<tc>, window_params = [{transform_indices = @transform_0, window_bounds = array<i64: 1, 2, 16, 16>}, {pipeline_mode = #tpu.pipeline_mode<synchronous>, transform_indices = @transform_1, window_bounds = array<i64: 32, 16>}, {pipeline_mode = #tpu.pipeline_mode<synchronous>, transform_indices = @transform_2, window_bounds = array<i64: 16, 32>}, {transform_indices = @transform_3, window_bounds = array<i64: 1, 2, 32, 32>}]} {
    %c0 = arith.constant 0 : index
    %c0_0 = arith.constant 0 : index
    %c0_1 = arith.constant 0 : index
    %c0_2 = arith.constant 0 : index
    %0 = vector.load %arg2[%c0, %c0_0, %c0_1, %c0_2] : memref<1x2x16x16xf32, #tpu.memory_space<vmem>>, vector<1x2x16x16xf32>
    %1 = vector.shape_cast %0 : vector<1x2x16x16xf32> to vector<2x16x16xf32>
    %2 = vector.shape_cast %1 : vector<2x16x16xf32> to vector<32x16xf32>
    %c0_3 = arith.constant 0 : index
    %c0_4 = arith.constant 0 : index
    %3 = vector.load %arg4[%c0_3, %c0_4] : memref<16x32xf32, #tpu.memory_space<vmem>>, vector<16x32xf32>
    %cst = arith.constant dense<0.000000e+00> : vector<32x32xf32>
    %4 = tpu.matmul %2, %3, %cst {dimension_numbers = #tpu.dot_dimension_numbers<[1], [0], [0], [1], [0, 0, 1, 1], [], []>} : vector<32x16xf32>, vector<16x32xf32>, vector<32x32xf32> -> vector<32x32xf32>
    %5 = vector.shape_cast %4 : vector<32x32xf32> to vector<2x16x32xf32>
    %c0_5 = arith.constant 0 : index
    %c0_6 = arith.constant 0 : index
    %6 = vector.load %arg3[%c0_5, %c0_6] : memref<32x16xf32, #tpu.memory_space<vmem>>, vector<32x16xf32>
    %7 = vector.shape_cast %6 : vector<32x16xf32> to vector<1x32x16xf32>
    %8 = vector.shape_cast %7 : vector<1x32x16xf32> to vector<1x32x16xf32>
    %9 = vector.broadcast %8 : vector<1x32x16xf32> to vector<2x32x16xf32>
    %cst_7 = arith.constant dense<0.000000e+00> : vector<2x32x32xf32>
    %10 = tpu.matmul %9, %5, %cst_7 {dimension_numbers = #tpu.dot_dimension_numbers<[2], [1], [1], [2], [0, 0, 0, 1, 1, 2], [0], [0]>} : vector<2x32x16xf32>, vector<2x16x32xf32>, vector<2x32x32xf32> -> vector<2x32x32xf32>
    %c0_8 = arith.constant 0 : index
    %c0_9 = arith.constant 0 : index
    %c0_10 = arith.constant 0 : index
    %c0_11 = arith.constant 0 : index
    %11 = vector.load %arg5[%c0_8, %c0_9, %c0_10, %c0_11] : memref<1x2x32x32xf32, #tpu.memory_space<vmem>>, vector<1x2x32x32xf32>
    %12 = vector.shape_cast %11 : vector<1x2x32x32xf32> to vector<2x32x32xf32>
    %13 = vector.shape_cast %10 : vector<2x32x32xf32> to vector<1x2x32x32xf32>
    tpu.vector_store %arg5[%c0_8, %c0_9, %c0_10, %c0_11], %13 {strides = array<i32>} : memref<1x2x32x32xf32, #tpu.memory_space<vmem>>, vector<1x2x32x32xf32>,
    return
  }
  func.func @transform_0(%arg0: i32, %arg1: i32) -> (i32, i32, i32, i32) {
    %c0_i32 = arith.constant 0 : i32
    %c0_i32_0 = arith.constant 0 : i32
    %c0_i32_1 = arith.constant 0 : i32
    return %arg0, %arg1, %c0_i32, %c0_i32_0 : i32, i32, i32, i32
  }
  func.func @transform_1(%arg0: i32, %arg1: i32) -> (i32, i32) {
    %c0_i32 = arith.constant 0 : i32
    %c0_i32_0 = arith.constant 0 : i32
    %c0_i32_1 = arith.constant 0 : i32
    return %c0_i32, %c0_i32_0 : i32, i32
  }
  func.func @transform_2(%arg0: i32, %arg1: i32) -> (i32, i32) {
    %c0_i32 = arith.constant 0 : i32
    %c0_i32_0 = arith.constant 0 : i32
    %c0_i32_1 = arith.constant 0 : i32
    return %c0_i32, %c0_i32_0 : i32, i32
  }
  func.func @transform_3(%arg0: i32, %arg1: i32) -> (i32, i32, i32, i32) {
    %c0_i32 = arith.constant 0 : i32
    %c0_i32_0 = arith.constant 0 : i32
    %c0_i32_1 = arith.constant 0 : i32
    return %arg0, %arg1, %c0_i32, %c0_i32_0 : i32, i32, i32, i32
  }
}

</mosaic_0001>

<llo_original>
// kernel: tpu_custom_call.1
$region0: #{tpu_custom_call.1}
  #allocation0 [shape = 'u32[]', space=smem, size = 0x4, offset = 0x4, fixed_abs, tag = 'smem constant byte address 0x4 - core index']
  #allocation1 [shape = 'u32[144,128]{1,0:T(1,128)}', space=vmem, size = 0x12000, scoped, tag = 'internal scratch']
  %s0 = inlined_call_operand.hbm [shape: f32[2,4,16,16], index: 0, kind: input, shape index: {}]
  %s1 = inlined_call_operand.vmem [shape: f32[32,16], index: 1, kind: input, shape index: {}]
  %s2 = inlined_call_operand.vmem [shape: f32[16,32], index: 2, kind: input, shape index: {}]
  %s3 = inlined_call_operand.hbm [shape: f32[2,4,32,32], index: 3, kind: output, shape index: {}]
  %s4 = sld [smem:[#allocation0]]
  $region49: #{tpu_custom_call.1} parent=0
    _
  %s6 = ssub.s32 1, %s4
  %s7 = scalar_select 0, %s6, %s4
  $region1: #{tpu_custom_call.1} parent=0
    #allocation2 [shape = 'u8[32768]{0}', space=vmem, size = 0x8000, scoped, tag = 'input window, operand 0']
    #allocation3 [shape = 's32[2]{0}', space=sflag, size = 0x8, scoped, tag = 'scoped memory for tpu_custom_call.1']
    #allocation4 [shape = 's32[2]{0}', space=sflag, size = 0x8, scoped, tag = 'scoped memory for tpu_custom_call.1']
    #allocation5 [shape = 'u8[65536]{0}', space=vmem, size = 0x10000, scoped, tag = 'output window, operand 0']
    %8 = vsyncpa [#allocation3], 0
    %s9 = scalar_lea.sflag [#allocation3], 1
    %10 = vsyncpa %s9, 0
    %11 = vsyncpa [#allocation4], 0
    %s12 = scalar_lea.sflag [#allocation4], 1
    %13 = vsyncpa %s12, 0
    loop: start=0, step=1, limit=6
    $region2: #{tpu_custom_call.1} parent=1 // loop_pre_header
      _
    $region3: #{tpu_custom_call.1} parent=1 // loop_header
      %s15 = sphi 0, %s19
      %p16 = scmp.ge.s32.totalorder %s15, 6
      %s22 = sphi 0, %s34
      %s23 = sphi 0, %s30
      %s24 = sphi 0, %s22
      %s25 = sphi 0, %s23
      %s26 = sphi 0, %s24
      %s27 = sphi 0, %s25
      %s39 = sphi 0, %s41
      %s42 = sphi 0, %s39
      %s43 = sphi 0, %s42
      %s59 = sphi 0, %s43
      %s63 = sphi 0, %s63
      %s65 = sphi 0, %s63
      %s66 = sphi 0, %s65
      %s80 = sphi 0, %s66
      %s84 = sphi 0, %s84
      %s86 = sphi 0, %s84
      %s87 = sphi 0, %s86
      %s101 = sphi 0, %s87
      %s109 = sphi 0, %s111
      %s112 = sphi 0, %s109
      %s113 = sphi 0, %s112
      %s129 = sphi 0, %s113
    $region4: #{tpu_custom_call.1} parent=1 // loop_header_branch
      %18 = sbr.rel (%p16) target = $region8
    $region5: #{tpu_custom_call.1} parent=1 // loop_body
      %s20 = ssub.s32 %s15, 1
      %s21 = ssub.s32 %s15, 2
      %s28 = sadd.s32 1, %s23
      %p29 = scmp.ge.s32.totalorder %s28, 2
      %s30 = scalar_select %p29, 0, %s28
      %s31 = sadd.s32 1, %s22
      %s32 = scalar_select %p29, %s31, %s22
      %p33 = scmp.ge.s32.totalorder %s32, 2
      %s34 = scalar_select %p33, 0, %s32
      %s35 = ssub.s32 %s22, %s34
      %s36 = ssub.s32 %s23, %s30
      %s37 = sor.u32 %s35, %s36
      %p38 = scmp.eq.s32.totalorder %s37, 0
      %s40 = sadd.s32 %s39, 1
      %s41 = scalar_select %p38, %s39, %s40
      %p44 = pneg %p38
      %p45 = scmp.eq.s32.totalorder %s15, 3
      %p46 = por %p44, %p45
      %p47 = scmp.ne.s32.totalorder %s39, %s42
      %p48 = scmp.eq.s32.totalorder %s15, 0
      %p49 = por %p47, %p48
      %p50 = scmp.ne.s32.totalorder %s39, %s42
      %p51 = scmp.eq.s32.totalorder %s20, 3
      %p52 = por %p50, %p51
      %p53 = scmp.ne.s32.totalorder %s42, %s43
      %p54 = scmp.eq.s32.totalorder %s20, 0
      %p55 = por %p53, %p54
      %p56 = scmp.ne.s32.totalorder %s42, %s43
      %p57 = scmp.eq.s32.totalorder %s21, 3
      %p58 = por %p56, %p57
      %p60 = scmp.ne.s32.totalorder %s43, %s59
      %p61 = scmp.eq.s32.totalorder %s21, 0
      %p62 = por %p60, %p61
      %s64 = sadd.s32 %s63, 1
      %p67 = scmp.eq.s32.totalorder %s15, 3
      %p68 = scmp.ne.s32.totalorder %s63, %s65
      %p69 = scmp.eq.s32.totalorder %s15, 0
      %p70 = por %p68, %p69
      %p71 = scmp.ne.s32.totalorder %s63, %s65
      %p72 = scmp.eq.s32.totalorder %s20, 3
      %p73 = por %p71, %p72
      %p74 = scmp.ne.s32.totalorder %s65, %s66
      %p75 = scmp.eq.s32.totalorder %s20, 0
      %p76 = por %p74, %p75
      %p77 = scmp.ne.s32.totalorder %s65, %s66
      %p78 = scmp.eq.s32.totalorder %s21, 3
      %p79 = por %p77, %p78
      %p81 = scmp.ne.s32.totalorder %s66, %s80
      %p82 = scmp.eq.s32.totalorder %s21, 0
      %p83 = por %p81, %p82
      %s85 = sadd.s32 %s84, 1
      %p88 = scmp.eq.s32.totalorder %s15, 3
      %p89 = scmp.ne.s32.totalorder %s84, %s86
      %p90 = scmp.eq.s32.totalorder %s15, 0
      %p91 = por %p89, %p90
      %p92 = scmp.ne.s32.totalorder %s84, %s86
      %p93 = scmp.eq.s32.totalorder %s20, 3
      %p94 = por %p92, %p93
      %p95 = scmp.ne.s32.totalorder %s86, %s87
      %p96 = scmp.eq.s32.totalorder %s20, 0
      %p97 = por %p95, %p96
      %p98 = scmp.ne.s32.totalorder %s86, %s87
      %p99 = scmp.eq.s32.totalorder %s21, 3
      %p100 = por %p98, %p99
      %p102 = scmp.ne.s32.totalorder %s87, %s101
      %p103 = scmp.eq.s32.totalorder %s21, 0
      %p104 = por %p102, %p103
      %s105 = ssub.s32 %s22, %s34
      %s106 = ssub.s32 %s23, %s30
      %s107 = sor.u32 %s105, %s106
      %p108 = scmp.eq.s32.totalorder %s107, 0
      %s110 = sadd.s32 %s109, 1
      %s111 = scalar_select %p108, %s109, %s110
      %p114 = pneg %p108
      %p115 = scmp.eq.s32.totalorder %s15, 3
      %p116 = por %p114, %p115
      %p117 = scmp.ne.s32.totalorder %s109, %s112
      %p118 = scmp.eq.s32.totalorder %s15, 0
      %p119 = por %p117, %p118
      %p120 = scmp.ne.s32.totalorder %s109, %s112
      %p121 = scmp.eq.s32.totalorder %s20, 3
      %p122 = por %p120, %p121
      %p123 = scmp.ne.s32.totalorder %s112, %s113
      %p124 = scmp.eq.s32.totalorder %s20, 0
      %p125 = por %p123, %p124
      %p126 = scmp.ne.s32.totalorder %s112, %s113
      %p127 = scmp.eq.s32.totalorder %s21, 3
      %p128 = por %p126, %p127
      %p130 = scmp.ne.s32.totalorder %s113, %s129
      %p131 = scmp.eq.s32.totalorder %s21, 0
      %p132 = por %p130, %p131
      %p133 = scmp.le.s32.totalorder 1, %s15
      %p134 = scmp.lt.s32.totalorder %s15, 5
      %p135 = pnand %p133, %p134
      %p136 = pneg %p135
      // Predicated region
      $region9: #{tpu_custom_call.1} parent=5 // pred_check
        _
      $region10: #{tpu_custom_call.1} parent=5 // pred_check_branch
        %138 = sbr.rel (%p135) target = $region12
      $region11: #{tpu_custom_call.1} parent=5 // pred_region
        %s139 = ssub.s32 %s15, 1
        // Predicated region
        $region13: #{tpu_custom_call.1} parent=11 // pred_check
          %p140 = pneg %p76
        $region14: #{tpu_custom_call.1} parent=11 // pred_check_branch
          %142 = sbr.rel (%p140) target = $region16
        $region15: #{tpu_custom_call.1} parent=11 // pred_region
          _
        $region16: #{tpu_custom_call.1} parent=11 // pred_fallthru
          _
        // Predicated region
        $region17: #{tpu_custom_call.1} parent=11 // pred_check
          %p143 = pneg %p97
        $region18: #{tpu_custom_call.1} parent=11 // pred_check_branch
          %145 = sbr.rel (%p143) target = $region20
        $region19: #{tpu_custom_call.1} parent=11 // pred_region
          _
        $region20: #{tpu_custom_call.1} parent=11 // pred_fallthru
          _
      $region12: #{tpu_custom_call.1} parent=5 // pred_fallthru
        _
      %p146 = scmp.lt.s32.totalorder %s15, 4
      // Predicated region
      $region21: #{tpu_custom_call.1} parent=5 // pred_check
        %p147 = pneg %p146
      $region22: #{tpu_custom_call.1} parent=5 // pred_check_branch
        %149 = sbr.rel (%p147) target = $region24
      $region23: #{tpu_custom_call.1} parent=5 // pred_region
        // Predicated region
        $region25: #{tpu_custom_call.1} parent=23 // pred_check
          %p150 = pneg %p49
        $region26: #{tpu_custom_call.1} parent=23 // pred_check_branch
          %152 = sbr.rel (%p150) target = $region28
        $region27: #{tpu_custom_call.1} parent=23 // pred_region
          %s153 = sand.u32 %s39, 1
          %s154 = scalar_lea.sflag [#allocation3], %s153
          %s155 = sand.u32 %s39, 1
          %s156 = smul.addr %s155, 32
          %s157 = scalar_lea.vmem [#allocation2], %s156
          %s158 = smul.u32 2, %s23
          %s160 = ssub.s32 512, 512
          %161 = vsyncadd %s154, %s160
          %s162 = smul.addr %s158, 2
          %s163 = smul.addr %s22, 8
          %s164 = sadd.s32 %s162, %s163
          %s165 = smul.addr %s164, 128
          %s166 = scalar_lea.hbm %s0, %s165
          %s167 = sshll.u32 %s157, 4
          %s168 = int_to_ptr.vmem [resolvable:$true] %s167
          %173 = dma.hbm_to_vmem [thread:$0]  %s166, 512, %s168, %s154, 128, 128, 8
        $region28: #{tpu_custom_call.1} parent=23 // pred_fallthru
          _
      $region24: #{tpu_custom_call.1} parent=5 // pred_fallthru
        _
      %p174 = scmp.le.s32.totalorder 1, %s15
      %p175 = scmp.lt.s32.totalorder %s15, 5
      %p176 = pnand %p174, %p175
      %p177 = pneg %p176
      // Predicated region
      $region29: #{tpu_custom_call.1} parent=5 // pred_check
        _
      $region30: #{tpu_custom_call.1} parent=5 // pred_check_branch
        %179 = sbr.rel (%p176) target = $region32
      $region31: #{tpu_custom_call.1} parent=5 // pred_region
        %s180 = ssub.s32 %s15, 1
        %s181 = sand.u32 %s42, 1
        %s182 = scalar_lea.sflag [#allocation3], %s181
        %s183 = sand.u32 %s42, 1
        %s184 = smul.addr %s183, 32
        %s185 = scalar_lea.vmem [#allocation2], %s184
        // Predicated region
        $region33: #{tpu_custom_call.1} parent=31 // pred_check
          %p186 = pneg %p55
        $region34: #{tpu_custom_call.1} parent=31 // pred_check_branch
          %188 = sbr.rel (%p186) target = $region36
        $region35: #{tpu_custom_call.1} parent=31 // pred_region
          %189 = dma.done %s182, 512
        $region36: #{tpu_custom_call.1} parent=31 // pred_fallthru
          _
        %s190 = sand.u32 %s42, 1
        %s191 = scalar_lea.sflag [#allocation3], %s190
        %s192 = sand.u32 %s42, 1
        %s193 = smul.addr %s192, 32
        %s194 = scalar_lea.vmem [#allocation2], %s193
        %p195 = pneg %p55
        %p196 = pneg %p52
        %p197 = pneg %p76
        %p198 = pneg %p73
        %p199 = pneg %p97
        %p200 = pneg %p94
        %p201 = pneg %p125
        %p202 = pneg %p122
        %s203 = sand.u32 %s112, 1
        %s204 = scalar_lea.sflag [#allocation4], %s203
        %s205 = sand.u32 %s112, 1
        %s206 = smul.addr %s205, 64
        %s207 = scalar_lea.vmem [#allocation5], %s206
        %s208 = smul.u32 2, %s25
        %s209 = smul.u32 2, %s25
        %v210 = vld [vmem:[%s185] sm:$0xff]
        %v211 = vld [vmem:[%s185 + $0x8] sm:$0xff]
        %v212 = vld [vmem:[%s185 + $0x10] sm:$0xff]
        %v213 = vld [vmem:[%s185 + $0x18] sm:$0xff]
        %v214 = vld [vmem:[%s2] sm:$0xff]
        %v215 = vld [vmem:[%s2 + $0x8] sm:$0xff]
        %vm216 = vcmask 130048
        %v218 = vsel %vm216, %v210, 0
        %v221 = vsel %vm216, %v211, 0
        %v224 = vsel %vm216, %v212, 0
        %v227 = vsel %vm216, %v213, 0
        %229 = vmatprep.subr.mxu0 0.0
        %230 = vmatpush1.msra.mxu0 0.0
        %231 = vmatprep.subr.mxu0 0.0
        %232 = vmatpush1.msra.mxu0 0.0
        %233 = vmatprep.subr.mxu0 0.0
        %234 = vmatpush1.msra.mxu0 0.0
        %235 = vmatprep.subr.mxu0 0.0
        %236 = vmatpush1.msra.mxu0 0.0
        %237 = vmatprep.subr.mxu0 0.0
        %238 = vmatpush1.msra.mxu0 0.0
        %239 = vmatprep.subr.mxu0 0.0
        %240 = vmatpush1.msra.mxu0 0.0
        %241 = vmatprep.subr.mxu0 0.0
        %242 = vmatpush1.msra.mxu0 0.0
        %243 = vmatprep.subr.mxu0 0.0
        %244 = vmatpush1.msra.mxu0 0.0
        %245 = vmatprep.subr.mxu0 0.0
        %246 = vmatpush1.msra.mxu0 0.0
        %247 = vmatprep.subr.mxu0 0.0
        %248 = vmatpush1.msra.mxu0 0.0
        %249 = vmatprep.subr.mxu0 0.0
        %250 = vmatpush1.msra.mxu0 0.0
        %251 = vmatprep.subr.mxu0 0.0
        %252 = vmatpush1.msra.mxu0 0.0
        %253 = vmatprep.subr.mxu0 0.0
        %254 = vmatpush1.msra.mxu0 0.0
        %255 = vmatprep.subr.mxu0 0.0
        %256 = vmatpush1.msra.mxu0 0.0
        %257 = vmatprep.subr.mxu0 0.0
        %258 = vmatpush1.msra.mxu0 %v215
        %259 = vmatprep.subr.mxu0 0.0
        %260 = vmatpush1.msra.mxu0 %v214
        %261 = vmatprep.subr.mxu0 0.0
        %262 = vmatpush2.msra.mxu0 0.0
        %263 = vmatprep.subr.mxu0 0.0
        %264 = vmatpush2.msra.mxu0 0.0
        %265 = vmatprep.subr.mxu0 0.0
        %266 = vmatpush2.msra.mxu0 0.0
        %267 = vmatprep.subr.mxu0 0.0
        %268 = vmatpush2.msra.mxu0 0.0
        %269 = vmatprep.subr.mxu0 0.0
        %270 = vmatpush2.msra.mxu0 0.0
        %271 = vmatprep.subr.mxu0 0.0
        %272 = vmatpush2.msra.mxu0 0.0
        %273 = vmatprep.subr.mxu0 0.0
        %274 = vmatpush2.msra.mxu0 0.0
        %275 = vmatprep.subr.mxu0 0.0
        %276 = vmatpush2.msra.mxu0 0.0
        %277 = vmatprep.subr.mxu0 0.0
        %278 = vmatpush2.msra.mxu0 0.0
        %279 = vmatprep.subr.mxu0 0.0
        %280 = vmatpush2.msra.mxu0 0.0
        %281 = vmatprep.subr.mxu0 0.0
        %282 = vmatpush2.msra.mxu0 0.0
        %283 = vmatprep.subr.mxu0 0.0
        %284 = vmatpush2.msra.mxu0 0.0
        %285 = vmatprep.subr.mxu0 0.0
        %286 = vmatpush2.msra.mxu0 0.0
        %287 = vmatprep.subr.mxu0 0.0
        %288 = vmatpush2.msra.mxu0 0.0
        %289 = vmatprep.subr.mxu0 0.0
        %290 = vmatpush2.msra.mxu0 0.0
        %291 = vmatprep.subr.mxu0 0.0
        %292 = vmatpush2.msra.mxu0 0.0
        %293 = vmatprep.mubr.f32.mxu0 0.0
        %294 = vmatmul.mubr.f32.gmra.mxu0 %v218
        %v295 = vpop.f32.mrf.mxu0
        %v296 = vadd.f32 0.0, %v295
        %v297 = vpop.f32.mrf.mxu0
        %298 = vmatprep.mubr.f32.mxu0 0.0
        %299 = vmatmul.mubr.f32.gmra.mxu0 %v221
        %v300 = vpop.f32.mrf.mxu0
        %v301 = vadd.f32 0.0, %v300
        %v302 = vpop.f32.mrf.mxu0
        %303 = vmatprep.mubr.f32.mxu0 0.0
        %304 = vmatmul.mubr.f32.gmra.mxu0 %v224
        %v305 = vpop.f32.mrf.mxu0
        %v306 = vadd.f32 0.0, %v305
        %v307 = vpop.f32.mrf.mxu0
        %308 = vmatprep.mubr.f32.mxu0 0.0
        %309 = vmatmul.mubr.f32.gmra.mxu0 %v227
        %v310 = vpop.f32.mrf.mxu0
        %v311 = vadd.f32 0.0, %v310
        %v312 = vpop.f32.mrf.mxu0
        %313 = vdwg.mxu0
        %v314 = vld [vmem:[%s1] sm:$0xff]
        %v315 = vld [vmem:[%s1 + $0x8] sm:$0xff]
        %v316 = vld [vmem:[%s1 + $0x10] sm:$0xff]
        %v317 = vld [vmem:[%s1 + $0x18] sm:$0xff]
        %v319 = vsel %vm216, %v314, 0
        %v322 = vsel %vm216, %v315, 0
        %v325 = vsel %vm216, %v316, 0
        %v328 = vsel %vm216, %v317, 0
        %330 = vmatprep.subr.mxu0 0.0
        %331 = vmatpush1.msra.mxu0 0.0
        %332 = vmatprep.subr.mxu0 0.0
        %333 = vmatpush1.msra.mxu0 0.0
        %334 = vmatprep.subr.mxu0 0.0
        %335 = vmatpush1.msra.mxu0 0.0
        %336 = vmatprep.subr.mxu0 0.0
        %337 = vmatpush1.msra.mxu0 0.0
        %338 = vmatprep.subr.mxu0 0.0
        %339 = vmatpush1.msra.mxu0 0.0
        %340 = vmatprep.subr.mxu0 0.0
        %341 = vmatpush1.msra.mxu0 0.0
        %342 = vmatprep.subr.mxu0 0.0
        %343 = vmatpush1.msra.mxu0 0.0
        %344 = vmatprep.subr.mxu0 0.0
        %345 = vmatpush1.msra.mxu0 0.0
        %346 = vmatprep.subr.mxu0 0.0
        %347 = vmatpush1.msra.mxu0 0.0
        %348 = vmatprep.subr.mxu0 0.0
        %349 = vmatpush1.msra.mxu0 0.0
        %350 = vmatprep.subr.mxu0 0.0
        %351 = vmatpush1.msra.mxu0 0.0
        %352 = vmatprep.subr.mxu0 0.0
        %353 = vmatpush1.msra.mxu0 0.0
        %354 = vmatprep.subr.mxu0 0.0
        %355 = vmatpush1.msra.mxu0 0.0
        %356 = vmatprep.subr.mxu0 0.0
        %357 = vmatpush1.msra.mxu0 0.0
        %358 = vmatprep.subr.mxu0 0.0
        %359 = vmatpush1.msra.mxu0 %v301
        %360 = vmatprep.subr.mxu0 0.0
        %361 = vmatpush1.msra.mxu0 %v296
        %362 = vmatprep.subr.mxu0 0.0
        %363 = vmatpush2.msra.mxu0 0.0
        %364 = vmatprep.subr.mxu0 0.0
        %365 = vmatpush2.msra.mxu0 0.0
        %366 = vmatprep.subr.mxu0 0.0
        %367 = vmatpush2.msra.mxu0 0.0
        %368 = vmatprep.subr.mxu0 0.0
        %369 = vmatpush2.msra.mxu0 0.0
        %370 = vmatprep.subr.mxu0 0.0
        %371 = vmatpush2.msra.mxu0 0.0
        %372 = vmatprep.subr.mxu0 0.0
        %373 = vmatpush2.msra.mxu0 0.0
        %374 = vmatprep.subr.mxu0 0.0
        %375 = vmatpush2.msra.mxu0 0.0
        %376 = vmatprep.subr.mxu0 0.0
        %377 = vmatpush2.msra.mxu0 0.0
        %378 = vmatprep.subr.mxu0 0.0
        %379 = vmatpush2.msra.mxu0 0.0
        %380 = vmatprep.subr.mxu0 0.0
        %381 = vmatpush2.msra.mxu0 0.0
        %382 = vmatprep.subr.mxu0 0.0
        %383 = vmatpush2.msra.mxu0 0.0
        %384 = vmatprep.subr.mxu0 0.0
        %385 = vmatpush2.msra.mxu0 0.0
        %386 = vmatprep.subr.mxu0 0.0
        %387 = vmatpush2.msra.mxu0 0.0
        %388 = vmatprep.subr.mxu0 0.0
        %389 = vmatpush2.msra.mxu0 0.0
        %390 = vmatprep.subr.mxu0 0.0
        %391 = vmatpush2.msra.mxu0 0.0
        %392 = vmatprep.subr.mxu0 0.0
        %393 = vmatpush2.msra.mxu0 0.0
        %394 = vmatprep.mubr.f32.mxu0 0.0
        %395 = vmatmul.mubr.f32.gmra.mxu0 %v319
        %v396 = vpop.f32.mrf.mxu0
        %v397 = vadd.f32 0.0, %v396
        %v398 = vpop.f32.mrf.mxu0
        %399 = vmatprep.mubr.f32.mxu0 0.0
        %400 = vmatmul.mubr.f32.gmra.mxu0 %v322
        %v401 = vpop.f32.mrf.mxu0
        %v402 = vadd.f32 0.0, %v401
        %v403 = vpop.f32.mrf.mxu0
        %404 = vmatprep.mubr.f32.mxu0 0.0
        %405 = vmatmul.mubr.f32.gmra.mxu0 %v325
        %v406 = vpop.f32.mrf.mxu0
        %v407 = vadd.f32 0.0, %v406
        %v408 = vpop.f32.mrf.mxu0
        %409 = vmatprep.mubr.f32.mxu0 0.0
        %410 = vmatmul.mubr.f32.gmra.mxu0 %v328
        %v411 = vpop.f32.mrf.mxu0
        %v412 = vadd.f32 0.0, %v411
        %v413 = vpop.f32.mrf.mxu0
        %414 = vdwg.mxu0
        %415 = vmatprep.subr.mxu0 0.0
        %416 = vmatpush1.msra.mxu0 0.0
        %417 = vmatprep.subr.mxu0 0.0
        %418 = vmatpush1.msra.mxu0 0.0
        %419 = vmatprep.subr.mxu0 0.0
        %420 = vmatpush1.msra.mxu0 0.0
        %421 = vmatprep.subr.mxu0 0.0
        %422 = vmatpush1.msra.mxu0 0.0
        %423 = vmatprep.subr.mxu0 0.0
        %424 = vmatpush1.msra.mxu0 0.0
        %425 = vmatprep.subr.mxu0 0.0
        %426 = vmatpush1.msra.mxu0 0.0
        %427 = vmatprep.subr.mxu0 0.0
        %428 = vmatpush1.msra.mxu0 0.0
        %429 = vmatprep.subr.mxu0 0.0
        %430 = vmatpush1.msra.mxu0 0.0
        %431 = vmatprep.subr.mxu0 0.0
        %432 = vmatpush1.msra.mxu0 0.0
        %433 = vmatprep.subr.mxu0 0.0
        %434 = vmatpush1.msra.mxu0 0.0
        %435 = vmatprep.subr.mxu0 0.0
        %436 = vmatpush1.msra.mxu0 0.0
        %437 = vmatprep.subr.mxu0 0.0
        %438 = vmatpush1.msra.mxu0 0.0
        %439 = vmatprep.subr.mxu0 0.0
        %440 = vmatpush1.msra.mxu0 0.0
        %441 = vmatprep.subr.mxu0 0.0
        %442 = vmatpush1.msra.mxu0 0.0
        %443 = vmatprep.subr.mxu0 0.0
        %444 = vmatpush1.msra.mxu0 %v311
        %445 = vmatprep.subr.mxu0 0.0
        %446 = vmatpush1.msra.mxu0 %v306
        %447 = vmatprep.subr.mxu0 0.0
        %448 = vmatpush2.msra.mxu0 0.0
        %449 = vmatprep.subr.mxu0 0.0
        %450 = vmatpush2.msra.mxu0 0.0
        %451 = vmatprep.subr.mxu0 0.0
        %452 = vmatpush2.msra.mxu0 0.0
        %453 = vmatprep.subr.mxu0 0.0
        %454 = vmatpush2.msra.mxu0 0.0
        %455 = vmatprep.subr.mxu0 0.0
        %456 = vmatpush2.msra.mxu0 0.0
        %457 = vmatprep.subr.mxu0 0.0
        %458 = vmatpush2.msra.mxu0 0.0
        %459 = vmatprep.subr.mxu0 0.0
        %460 = vmatpush2.msra.mxu0 0.0
        %461 = vmatprep.subr.mxu0 0.0
        %462 = vmatpush2.msra.mxu0 0.0
        %463 = vmatprep.subr.mxu0 0.0
        %464 = vmatpush2.msra.mxu0 0.0
        %465 = vmatprep.subr.mxu0 0.0
        %466 = vmatpush2.msra.mxu0 0.0
        %467 = vmatprep.subr.mxu0 0.0
        %468 = vmatpush2.msra.mxu0 0.0
        %469 = vmatprep.subr.mxu0 0.0
        %470 = vmatpush2.msra.mxu0 0.0
        %471 = vmatprep.subr.mxu0 0.0
        %472 = vmatpush2.msra.mxu0 0.0
        %473 = vmatprep.subr.mxu0 0.0
        %474 = vmatpush2.msra.mxu0 0.0
        %475 = vmatprep.subr.mxu0 0.0
        %476 = vmatpush2.msra.mxu0 0.0
        %477 = vmatprep.subr.mxu0 0.0
        %478 = vmatpush2.msra.mxu0 0.0
        %479 = vmatprep.mubr.f32.mxu0 0.0
        %480 = vmatmul.mubr.f32.gmra.mxu0 %v319
        %v481 = vpop.f32.mrf.mxu0
        %v482 = vadd.f32 0.0, %v481
        %v483 = vpop.f32.mrf.mxu0
        %484 = vmatprep.mubr.f32.mxu0 0.0
        %485 = vmatmul.mubr.f32.gmra.mxu0 %v322
        %v486 = vpop.f32.mrf.mxu0
        %v487 = vadd.f32 0.0, %v486
        %v488 = vpop.f32.mrf.mxu0
        %489 = vmatprep.mubr.f32.mxu0 0.0
        %490 = vmatmul.mubr.f32.gmra.mxu0 %v325
        %v491 = vpop.f32.mrf.mxu0
        %v492 = vadd.f32 0.0, %v491
        %v493 = vpop.f32.mrf.mxu0
        %494 = vmatprep.mubr.f32.mxu0 0.0
        %495 = vmatmul.mubr.f32.gmra.mxu0 %v328
        %v496 = vpop.f32.mrf.mxu0
        %v497 = vadd.f32 0.0, %v496
        %v498 = vpop.f32.mrf.mxu0
        %499 = vdwg.mxu0
        %vm500 = vcmask 261120
        %501 = vst.msk [vmem:[%s207] sm:$0xff] %vm500, %v397
        %502 = vst.msk [vmem:[%s207 + $0x8] sm:$0xff] %vm500, %v402
        %503 = vst.msk [vmem:[%s207 + $0x10] sm:$0xff] %vm500, %v407
        %504 = vst.msk [vmem:[%s207 + $0x18] sm:$0xff] %vm500, %v412
        %505 = vst.msk [vmem:[%s207 + $0x20] sm:$0xff] %vm500, %v482
        %506 = vst.msk [vmem:[%s207 + $0x28] sm:$0xff] %vm500, %v487
        %507 = vst.msk [vmem:[%s207 + $0x30] sm:$0xff] %vm500, %v492
        %508 = vst.msk [vmem:[%s207 + $0x38] sm:$0xff] %vm500, %v497
        %s509 = sand.u32 %s112, 1
        %s510 = scalar_lea.sflag [#allocation4], %s509
        %s511 = sand.u32 %s112, 1
        %s512 = smul.addr %s511, 64
        %s513 = scalar_lea.vmem [#allocation5], %s512
        // Predicated region
        $region37: #{tpu_custom_call.1} parent=31 // pred_check
          %p514 = pneg %p122
        $region38: #{tpu_custom_call.1} parent=31 // pred_check_branch
          %516 = sbr.rel (%p514) target = $region40
        $region39: #{tpu_custom_call.1} parent=31 // pred_region
          %s517 = smul.u32 2, %s25
          %s519 = ssub.s32 1024, 1024
          %520 = vsyncadd %s510, %s519
          %s521 = smul.addr %s517, 4
          %s522 = smul.addr %s24, 16
          %s523 = sadd.s32 %s521, %s522
          %s524 = smul.addr %s523, 128
          %s525 = scalar_lea.hbm %s3, %s524
          %s526 = sshll.u32 %s513, 4
          %s527 = int_to_ptr.vmem [resolvable:$true] %s526
          %532 = dma.vmem_to_hbm [thread:$0]  %s527, 1024, %s525, %s510, 128, 128, 8
        $region40: #{tpu_custom_call.1} parent=31 // pred_fallthru
          _
      $region32: #{tpu_custom_call.1} parent=5 // pred_fallthru
        _
      %p533 = scmp.le.s32.totalorder 2, %s15
      // Predicated region
      $region41: #{tpu_custom_call.1} parent=5 // pred_check
        %p534 = pneg %p533
      $region42: #{tpu_custom_call.1} parent=5 // pred_check_branch
        %536 = sbr.rel (%p534) target = $region44
      $region43: #{tpu_custom_call.1} parent=5 // pred_region
        %s537 = ssub.s32 %s15, 2
        // Predicated region
        $region45: #{tpu_custom_call.1} parent=43 // pred_check
          %p538 = pneg %p128
        $region46: #{tpu_custom_call.1} parent=43 // pred_check_branch
          %540 = sbr.rel (%p538) target = $region48
        $region47: #{tpu_custom_call.1} parent=43 // pred_region
          %s541 = sand.u32 %s113, 1
          %s542 = scalar_lea.sflag [#allocation4], %s541
          %s543 = sand.u32 %s113, 1
          %s544 = smul.addr %s543, 64
          %s545 = scalar_lea.vmem [#allocation5], %s544
          %546 = dma.done %s542, 1024
        $region48: #{tpu_custom_call.1} parent=43 // pred_fallthru
          _
      $region44: #{tpu_custom_call.1} parent=5 // pred_fallthru
        _
    $region6: #{tpu_custom_call.1} parent=1 // loop_footer
      %s19 = sadd.s32 1, %s15
    $region7: #{tpu_custom_call.1} parent=1 // loop_footer_branch
      %14 = sbr.rel target = $region3
    $region8: #{tpu_custom_call.1} parent=1 // loop_exit
      _
    %547 = vsyncpa [#allocation3], 1
    %s548 = scalar_lea.sflag [#allocation3], 1
    %549 = vsyncpa %s548, 1
    %550 = vsyncpa [#allocation4], 1
    %s551 = scalar_lea.sflag [#allocation4], 1
    %552 = vsyncpa %s551, 1

</llo_original>
